<compile_context>
chip_gen: v6e
topology: v6e:2x2x1
jax: 0.10.0
libtpu: 0.0.40
codegen_flags: <defaults>
</compile_context>

<pallas_src>
import functools
import random

import jax
import jax.numpy as jnp
from jax.experimental import pallas as pl
from jax.experimental.pallas import tpu as pltpu


def _cond_layernorm_kernel(x_ref, ab_ref, o_ref, *, eps):
    # x_ref: (Tn, H) rows of the flattened input; ab_ref: (2, H) f32 scale/shift.
    x = x_ref[...].astype(jnp.float32)
    a = ab_ref[0:1, :]
    b = ab_ref[1:2, :]
    mean = jnp.mean(x, axis=-1, keepdims=True)
    xc = x - mean
    var = jnp.mean(xc * xc, axis=-1, keepdims=True)
    inv = jax.lax.rsqrt(var + eps)
    y = xc * inv * a + b
    o_ref[...] = y.astype(o_ref.dtype)


def _round_up(v, m):
    return (v + m - 1) // m * m


def conditional_layer_norm_pallas(x, ln_weight, ln_bias, z_i, l1_weight,
                                  l1_bias, gates, *, eps=1e-5,
                                  drop_probability=0.0):
    """Pallas equivalent of ConditionalLayerNorm.forward.

    x:          (..., H) input, layer-normalized over the last dim.
    ln_weight:  (H,)   LN.weight
    ln_bias:    (H,)   LN.bias
    z_i:        (T,)   task embedding Z_i
    l1_weight:  (2H,T) L1.weight (PyTorch layout: out_features x in_features)
    l1_bias:    (2H,)  L1.bias
    gates:      (2,)   self.gates parameter
    """
    H = x.shape[-1]

    # ---- conditioning (tiny, done once in f32 in the wrapper) ----
    gate = jax.nn.sigmoid(gates.astype(jnp.float32))
    # TODO(synk): the stochastic drop is a host/trace-time decision (same as
    # torch's `random.random()`); under jax.jit it is baked into the trace and
    # not resampled per call.
    if random.random() < drop_probability:
        a = ln_weight.astype(jnp.float32)
        b = ln_bias.astype(jnp.float32)
    else:
        cd = (l1_weight.astype(jnp.float32) @ z_i.astype(jnp.float32)
              + l1_bias.astype(jnp.float32))
        c, d = cd[:H], cd[H:]
        a = gate[0] * c + ln_weight.astype(jnp.float32)
        b = gate[1] * d + ln_bias.astype(jnp.float32)
    ab = jnp.stack([a, b], axis=0)  # (2, H) f32 scale/shift

    # ---- flatten leading dims to a row axis and tile rows ----
    orig_shape = x.shape
    n_rows = 1
    for s in orig_shape[:-1]:
        n_rows *= s
    xf = x.reshape(n_rows, H)

    # Row tile: multiple of 8 sublanes, sized so each tile buffer is ~<=2 MiB
    # (f32 accounting for in-kernel intermediates). Double-buffered in + out
    # tiles then stay well under the scoped-VMEM defaults on v5e/v6e/v7x,
    # while the per-grid-step overhead (~0.35 us) is amortized away.
    bytes_per_row = H * 4
    tile = (2 * 1024 * 1024) // max(bytes_per_row, 1)
    tile = max(8, min(2048, tile // 8 * 8))
    tile = min(tile, _round_up(n_rows, 8))

    n_pad = _round_up(n_rows, tile)
    if n_pad != n_rows:
        # Padded rows produce harmless finite values (var=0 -> value=b) and
        # are sliced off below.
        xf = jnp.pad(xf, ((0, n_pad - n_rows), (0, 0)))

    out = pl.pallas_call(
        functools.partial(_cond_layernorm_kernel, eps=float(eps)),
        out_shape=jax.ShapeDtypeStruct((n_pad, H), x.dtype),
        grid=(n_pad // tile,),
        in_specs=[
            pl.BlockSpec((tile, H), lambda i: (i, 0)),
            pl.BlockSpec((2, H), lambda i: (0, 0)),
        ],
        out_specs=pl.BlockSpec((tile, H), lambda i: (i, 0)),
        compiler_params=pltpu.CompilerParams(
            dimension_semantics=("parallel",),
            vmem_limit_bytes=32 * 1024 * 1024),
    )(xf, ab)

    if n_pad != n_rows:
        out = out[:n_rows]
    return out.reshape(orig_shape)


if __name__ == "__main__":
    random.seed(0)

    # Small shapes consistent with the module: batch=2, seq=8, hidden=32, task-emb=16.
    B, S, H, T = 2, 8, 32, 16
    key = jax.random.PRNGKey(0)
    kx, kz, kw, klw, klb = jax.random.split(key, 5)

    x = jax.random.normal(kx, (B, S, H), dtype=jnp.float32)
    z_i = jax.random.normal(kz, (T,), dtype=jnp.float32)
    ln_weight = 1.0 + 0.1 * jax.random.normal(klw, (H,), dtype=jnp.float32)
    ln_bias = 0.1 * jax.random.normal(klb, (H,), dtype=jnp.float32)
    # L1 init mirrors weight_init: normal(0, 0.001/sqrt(k)) clamped, zero bias.
    std = 0.001 / (H ** 0.5)
    l1_weight = jnp.clip(std * jax.random.normal(kw, (2 * H, T), dtype=jnp.float32),
                         -2 * std, 2 * std)
    l1_bias = jnp.zeros((2 * H,), dtype=jnp.float32)
    gates = jnp.ones((2,), dtype=jnp.float32)
    eps = 1e-5

    out = conditional_layer_norm_pallas(
        x, ln_weight, ln_bias, z_i, l1_weight, l1_bias, gates,
        eps=eps, drop_probability=0.0)
    out = jax.block_until_ready(out)

    # Reference semantics (pure JAX), drop branch not taken (drop_probability=0).
    g = jax.nn.sigmoid(gates)
    cd = l1_weight @ z_i + l1_bias
    a_ref = g[0] * cd[:H] + ln_weight
    b_ref = g[1] * cd[H:] + ln_bias
    mean = jnp.mean(x, axis=-1, keepdims=True)
    var = jnp.mean((x - mean) ** 2, axis=-1, keepdims=True)
    ref = (x - mean) * jax.lax.rsqrt(var + eps) * a_ref + b_ref

    assert out.shape == x.shape and out.dtype == x.dtype
    assert jnp.allclose(out, ref, atol=1e-5, rtol=1e-5), "mismatch vs reference"

    # Also exercise a 2D input (layer_norm over last dim of (S, H)).
    x2 = x[0]
    out2 = jax.block_until_ready(conditional_layer_norm_pallas(
        x2, ln_weight, ln_bias, z_i, l1_weight, l1_bias, gates,
        eps=eps, drop_probability=0.0))
    assert jnp.allclose(out2, ref[0], atol=1e-5, rtol=1e-5), "2D mismatch vs reference"

    # And a bf16 input (stats in f32, output cast back to bf16).
    xb = x.astype(jnp.bfloat16)
    outb = jax.block_until_ready(conditional_layer_norm_pallas(
        xb, ln_weight, ln_bias, z_i, l1_weight, l1_bias, gates,
        eps=eps, drop_probability=0.0))
    assert outb.dtype == jnp.bfloat16
    assert jnp.allclose(outb.astype(jnp.float32), ref, atol=3e-2, rtol=3e-2), \
        "bf16 mismatch vs reference"

    print("KERNEL_OK")
</pallas_src>

<mosaic_0001>
module attributes {stable_mosaic.version = 11 : i64} {
  func.func @_cond_layernorm_kernel(%arg0: i32, %arg1: memref<16x32xf32, #tpu.memory_space<vmem>>, %arg2: memref<2x32xf32, #tpu.memory_space<vmem>>, %arg3: memref<16x32xf32, #tpu.memory_space<vmem>>) attributes {dimension_semantics = [#tpu.dimension_semantics<parallel>], iteration_bounds = array<i64: 1>, scalar_prefetch = 0 : i64, scratch_operands = 0 : i64, tpu.core_type = #tpu.core_type<tc>, window_params = [{transform_indices = @transform_0, window_bounds = array<i64: 16, 32>}, {pipeline_mode = #tpu.pipeline_mode<synchronous>, transform_indices = @transform_1, window_bounds = array<i64: 2, 32>}, {transform_indices = @transform_2, window_bounds = array<i64: 16, 32>}]} {
    %c0 = arith.constant 0 : index
    %c0_0 = arith.constant 0 : index
    %0 = vector.load %arg1[%c0, %c0_0] : memref<16x32xf32, #tpu.memory_space<vmem>>, vector<16x32xf32>
    %c0_1 = arith.constant 0 : index
    %c0_2 = arith.constant 0 : index
    %1 = vector.load %arg2[%c0_1, %c0_2] : memref<2x32xf32, #tpu.memory_space<vmem>>, vector<1x32xf32>
    %c1 = arith.constant 1 : index
    %c0_3 = arith.constant 0 : index
    %2 = vector.load %arg2[%c1, %c0_3] : memref<2x32xf32, #tpu.memory_space<vmem>>, vector<1x32xf32>
    %cst = arith.constant dense<0.000000e+00> : vector<16xf32>
    %3 = vector.multi_reduction <add>, %0, %cst [1] : vector<16x32xf32> to vector<16xf32>
    %4 = vector.shape_cast %3 : vector<16xf32> to vector<16x1xf32>
    %cst_4 = arith.constant 3.200000e+01 : f32
    %5 = vector.broadcast %cst_4 : f32 to vector<16x1xf32>
    %6 = arith.divf %4, %5 : vector<16x1xf32>
    %7 = vector.broadcast %6 : vector<16x1xf32> to vector<16x32xf32>
    %8 = arith.subf %0, %7 : vector<16x32xf32>
    %9 = arith.mulf %8, %8 : vector<16x32xf32>
    %cst_5 = arith.constant dense<0.000000e+00> : vector<16xf32>
    %10 = vector.multi_reduction <add>, %9, %cst_5 [1] : vector<16x32xf32> to vector<16xf32>
    %11 = vector.shape_cast %10 : vector<16xf32> to vector<16x1xf32>
    %cst_6 = arith.constant 3.200000e+01 : f32
    %12 = vector.broadcast %cst_6 : f32 to vector<16x1xf32>
    %13 = arith.divf %11, %12 : vector<16x1xf32>
    %cst_7 = arith.constant 9.99999974E-6 : f32
    %14 = vector.broadcast %cst_7 : f32 to vector<16x1xf32>
    %15 = arith.addf %13, %14 : vector<16x1xf32>
    %16 = math.rsqrt %15 : vector<16x1xf32>
    %17 = vector.broadcast %16 : vector<16x1xf32> to vector<16x32xf32>
    %18 = arith.mulf %8, %17 : vector<16x32xf32>
    %19 = vector.broadcast %1 : vector<1x32xf32> to vector<16x32xf32>
    %20 = arith.mulf %18, %19 : vector<16x32xf32>
    %21 = vector.broadcast %2 : vector<1x32xf32> to vector<16x32xf32>
    %22 = arith.addf %20, %21 : vector<16x32xf32>
    %c0_8 = arith.constant 0 : index
    %c0_9 = arith.constant 0 : index
    %23 = vector.load %arg3[%c0_8, %c0_9] : memref<16x32xf32, #tpu.memory_space<vmem>>, vector<16x32xf32>
    tpu.vector_store %arg3[%c0_8, %c0_9], %22 {strides = array<i32>} : memref<16x32xf32, #tpu.memory_space<vmem>>, vector<16x32xf32>,
    return
  }
  func.func @transform_0(%arg0: i32) -> (i32, i32) {
    %c0_i32 = arith.constant 0 : i32
    %c0_i32_0 = arith.constant 0 : i32
    return %arg0, %c0_i32 : i32, i32
  }
  func.func @transform_1(%arg0: i32) -> (i32, i32) {
    %c0_i32 = arith.constant 0 : i32
    %c0_i32_0 = arith.constant 0 : i32
    %c0_i32_1 = arith.constant 0 : i32
    return %c0_i32, %c0_i32_0 : i32, i32
  }
  func.func @transform_2(%arg0: i32) -> (i32, i32) {
    %c0_i32 = arith.constant 0 : i32
    %c0_i32_0 = arith.constant 0 : i32
    return %arg0, %c0_i32 : i32, i32
  }
}

</mosaic_0001>

<llo_original>
// kernel: tpu_custom_call.1
$region0: #{tpu_custom_call.1}
  #allocation0 [shape = 'u32[]', space=smem, size = 0x4, offset = 0x4, fixed_abs, tag = 'smem constant byte address 0x4 - core index']
  #allocation1 [shape = 'u32[144,128]{1,0:T(1,128)}', space=vmem, size = 0x12000, scoped, tag = 'internal scratch']
  %s0 = inlined_call_operand.hbm [shape: f32[16,32], index: 0, kind: input, shape index: {}]
  %s1 = inlined_call_operand.hbm [shape: f32[2,32], index: 1, kind: input, shape index: {}]
  %s2 = inlined_call_operand.hbm [shape: f32[16,32], index: 2, kind: output, shape index: {}]
  %s3 = sld [smem:[#allocation0]]
  $region26: #{tpu_custom_call.1} parent=0
    _
  %s5 = ssub.s32 1, %s3
  %s6 = scalar_select 0, %s5, %s3
  $region1: #{tpu_custom_call.1} parent=0
    #allocation2 [shape = 'u8[8192]{0}', space=vmem, size = 0x2000, scoped, tag = 'input window, operand 0, single buffered']
    #allocation3 [shape = 's32[1]{0}', space=sflag, size = 0x4, scoped, tag = 'scoped memory for tpu_custom_call.1']
    #allocation4 [shape = 's32[1]{0}', space=sflag, size = 0x4, scoped, tag = 'scoped memory for tpu_custom_call.1']
    #allocation5 [shape = 'u8[1024]{0}', space=vmem, size = 0x400, scoped, tag = 'input window, operand 1, single buffered']
    #allocation6 [shape = 's32[1]{0}', space=sflag, size = 0x4, scoped, tag = 'scoped memory for tpu_custom_call.1']
    #allocation7 [shape = 'u8[8192]{0}', space=vmem, size = 0x2000, scoped, tag = 'output window, operand 0, single buffered']
    %7 = vsyncpa [#allocation3], 0
    %8 = vsyncpa [#allocation6], 0
    %9 = vsyncpa [#allocation4], 0
    // Predicated region
    $region2: #{tpu_custom_call.1} parent=1 // pred_check
      _
    $region3: #{tpu_custom_call.1} parent=1 // pred_check_branch
      %11 = sbr.rel (0) target = $region5
    $region4: #{tpu_custom_call.1} parent=1 // pred_region
      %s13 = ssub.s32 256, 256
      %14 = vsyncadd [#allocation3], %s13
      %s15 = sshll.u32 [#allocation2], 4
      %s16 = int_to_ptr.vmem [resolvable:$true] %s15
      %21 = dma.hbm_to_vmem [thread:$0]  %s0, 256, %s16, [#allocation3], 128, 128, 8
    $region5: #{tpu_custom_call.1} parent=1 // pred_fallthru
      _
    // Predicated region
    $region6: #{tpu_custom_call.1} parent=1 // pred_check
      _
    $region7: #{tpu_custom_call.1} parent=1 // pred_check_branch
      %23 = sbr.rel (0) target = $region9
    $region8: #{tpu_custom_call.1} parent=1 // pred_region
      %s25 = ssub.s32 32, 32
      %26 = vsyncadd [#allocation6], %s25
      %s28 = sshll.u32 [#allocation5], 4
      %s29 = int_to_ptr.vmem [resolvable:$true] %s28
      %31 = dma.hbm_to_vmem [thread:$0]  %s1, 32, %s29, [#allocation6]
    $region9: #{tpu_custom_call.1} parent=1 // pred_fallthru
      _
    // Predicated region
    $region10: #{tpu_custom_call.1} parent=1 // pred_check
      _
    $region11: #{tpu_custom_call.1} parent=1 // pred_check_branch
      %33 = sbr.rel (0) target = $region13
    $region12: #{tpu_custom_call.1} parent=1 // pred_region
      %34 = dma.done [#allocation3], 256
    $region13: #{tpu_custom_call.1} parent=1 // pred_fallthru
      _
    // Predicated region
    $region14: #{tpu_custom_call.1} parent=1 // pred_check
      _
    $region15: #{tpu_custom_call.1} parent=1 // pred_check_branch
      %36 = sbr.rel (0) target = $region17
    $region16: #{tpu_custom_call.1} parent=1 // pred_region
      %37 = dma.done [#allocation6], 32
    $region17: #{tpu_custom_call.1} parent=1 // pred_fallthru
      _
    %v38 = vld [vmem:[#allocation2] sm:$0xff]
    %v39 = vld [vmem:[#allocation2 + $0x8] sm:$0xff]
    %v40 = vld [vmem:[#allocation5] sm:$0x1]
    %v41 = vld [vmem:[#allocation5 + $0x1] sm:$0x1]
    %vm42 = vcmask 261120
    %v43 = vsel %vm42, %v38, 0.0
    %44 = vadd.xlane.f32.xlu0 %v43
    %v45 = vpop.xlane.xlu0 %44
    %v46 = vsel %vm42, %v39, 0.0
    %47 = vadd.xlane.f32.xlu0 %v46
    %v48 = vpop.xlane.xlu0 %47
    %v49 = vrcp.pop 32.0
    %v50 = vmul.f32 %v45, %v49
    %v51 = vmul.f32 %v48, %v49
    %v52 = vsub.f32 %v38, %v50
    %v53 = vsub.f32 %v39, %v51
    %v54 = vmul.f32 %v52, %v52
    %v55 = vmul.f32 %v53, %v53
    %v56 = vsel %vm42, %v54, 0.0
    %57 = vadd.xlane.f32.xlu0 %v56
    %v58 = vpop.xlane.xlu0 %57
    %v59 = vsel %vm42, %v55, 0.0
    %60 = vadd.xlane.f32.xlu0 %v59
    %v61 = vpop.xlane.xlu0 %60
    %v62 = vmul.f32 %v58, %v49
    %v63 = vmul.f32 %v61, %v49
    %v64 = vadd.f32 %v62, 1e-05
    %v65 = vadd.f32 %v63, 1e-05
    %v66 = vrsqrt.pop %v64
    %v67 = vrsqrt.pop %v65
    %v68 = vmul.f32 %v52, %v66
    %v69 = vmul.f32 %v53, %v67
    %v70 = vlaneseq
    %v71 = vshrl.u32 %v70, 7
    %v72 = vsub.s32 0, %v71
    %v73 = vrot.slane %v40, %v72
    %v74 = vmul.f32 %v68, %v73
    %v75 = vmul.f32 %v69, %v73
    %v76 = vlaneseq
    %v77 = vshrl.u32 %v76, 7
    %v78 = vsub.s32 0, %v77
    %v79 = vrot.slane %v41, %v78
    %v80 = vadd.f32 %v74, %v79
    %v81 = vadd.f32 %v75, %v79
    %82 = vst.msk [vmem:[#allocation7] sm:$0xff] %vm42, %v80
    %83 = vst.msk [vmem:[#allocation7 + $0x8] sm:$0xff] %vm42, %v81
    // Predicated region
    $region18: #{tpu_custom_call.1} parent=1 // pred_check
      _
    $region19: #{tpu_custom_call.1} parent=1 // pred_check_branch
      %85 = sbr.rel (0) target = $region21
    $region20: #{tpu_custom_call.1} parent=1 // pred_region
      %s87 = ssub.s32 256, 256
      %88 = vsyncadd [#allocation4], %s87
      %s89 = sshll.u32 [#allocation7], 4
      %s90 = int_to_ptr.vmem [resolvable:$true] %s89
      %95 = dma.vmem_to_hbm [thread:$0]  %s90, 256, %s2, [#allocation4], 128, 128, 8
    $region21: #{tpu_custom_call.1} parent=1 // pred_fallthru
      _
    // Predicated region
    $region22: #{tpu_custom_call.1} parent=1 // pred_check
      _
    $region23: #{tpu_custom_call.1} parent=1 // pred_check_branch
      %97 = sbr.rel (0) target = $region25
    $region24: #{tpu_custom_call.1} parent=1 // pred_region
      %98 = dma.done [#allocation4], 256
    $region25: #{tpu_custom_call.1} parent=1 // pred_fallthru
      _
    %99 = vsyncpa [#allocation3], 1
    %100 = vsyncpa [#allocation6], 1
    %101 = vsyncpa [#allocation4], 1

</llo_original>
